<compile_context>
chip_gen: v5e
topology: v5e:2x2
jax: 0.10.0
libtpu: 0.0.40
codegen_flags: <defaults>
</compile_context>

<pallas_src>
import functools

import numpy as np
import jax
import jax.numpy as jnp
from jax.experimental import pallas as pl
from jax.experimental.pallas import tpu as pltpu


# ---------------------------------------------------------------------------
# Kernels
# ---------------------------------------------------------------------------

def _hist_kernel_lane_aligned(wb_ref, x_ref, o_ref, *, bin_num):
    """Fast path (HW % 128 == 0).

    wb_ref : (2, bin_num) f32 in SMEM  (row 0 = scaled weight, row 1 = scaled bias)
    x_ref  : (TN, TS, 128) f32 in VMEM
    o_ref  : (TN, bin_num, TS, 128) in VMEM
    """
    x = x_ref[...]                                     # (TN, TS, 128)
    for k in range(bin_num):                           # static unroll over bins
        w = wb_ref[0, k]                               # SMEM scalar splat
        b = wb_ref[1, k]
        val = jnp.maximum(1.0 - jnp.abs(w * x + b), 0.0)
        o_ref[:, k, :, :] = val.astype(o_ref.dtype)    # dense (TN, TS, 128) store


def _hist_kernel_ragged(x_ref, w_ref, b_ref, o_ref):
    """Fallback path (HW not a multiple of 128).

    x_ref : (TN, 1, TH) f32    w_ref/b_ref : (bin_num, 1) f32 (scale pre-folded)
    o_ref : (TN, bin_num, TH)
    """
    x = x_ref[...]                          # (TN, 1, TH)
    w = w_ref[...][None, :, :]              # (1, bin_num, 1)
    b = b_ref[...][None, :, :]              # (1, bin_num, 1)
    a = jnp.abs(w * x + b)                  # (TN, bin_num, TH)
    o_ref[...] = jnp.maximum(1.0 - a, 0.0).astype(o_ref.dtype)


# ---------------------------------------------------------------------------
# Tile selection (targets ~4 MiB of *real* double-buffered footprint per step)
# ---------------------------------------------------------------------------

def _choose_tiles_lane_aligned(N, S, bin_num, budget_bytes=4 << 20):
    # footprint/step ≈ 2 (dbl buf) * 4 B * (1 + bin_num) * TN * TS * 128
    row_cap = max(1, budget_bytes // (2 * 4 * (1 + bin_num) * 128))   # cap on TN*TS
    if S <= row_cap:
        TS = S                                    # full extent: always legal
        TN = max(1, min(N, row_cap // max(S, 1)))
    else:
        TS = max(8, (min(row_cap, S) // 8) * 8)   # multiple of 8 (sublane dim)
        TS = min(TS, S)
        TN = 1
    return TN, TS


def _choose_tiles_ragged(N, HW, bin_num, budget_bytes=4 << 20):
    # x block (TN, 1, TH): the size-1 channel dim pads to 8 sublanes -> 8x inflation for x.
    # footprint/step ≈ 2 * 4 B * TH * TN * (8 + bin_num)
    per_lane = 2 * 4 * (8 + bin_num)
    lane_cap = max(128, budget_bytes // per_lane)
    if HW < 128:
        TH = HW                                   # full-extent lane block (legal)
    elif HW <= lane_cap:
        TH = (HW // 128) * 128                    # partial trailing block masked by Pallas
    else:
        TH = max(128, (lane_cap // 128) * 128)
    TN = max(1, min(N, lane_cap // max(TH, 1)))   # fold batch when spatial tile is small
    return TN, TH


# ---------------------------------------------------------------------------
# Wrapper
# ---------------------------------------------------------------------------

def histogram_net(x_nchw, weight, bias, bin_num, out_dtype=jnp.float32):
    """x_nchw: (N, 1, H, W);  weight: (bin_num, 1, 1, 1);  bias: (bin_num,)."""
    N, C, H, W = x_nchw.shape
    assert C == 1, "HistogramNet expects a single input channel"
    HW = H * W

    # Pre-fold the (bin_num - 1) scale:  1 - (bin_num-1)*|w*x+b| == 1 - |w'*x + b'|.
    scale = jnp.float32(bin_num - 1)
    w2 = weight.reshape(bin_num).astype(jnp.float32) * scale
    b2 = bias.reshape(bin_num).astype(jnp.float32) * scale

    out_itemsize = np.dtype(out_dtype).itemsize
    cost = pl.CostEstimate(
        flops=5 * bin_num * N * HW,
        transcendentals=0,
        bytes_accessed=int(4 * N * HW + out_itemsize * N * bin_num * HW),
    )
    cparams = pltpu.CompilerParams(dimension_semantics=("parallel", "parallel"))

    if HW % 128 == 0:
        # ---- lane-aligned fast path ------------------------------------------------
        S = HW // 128
        TN, TS = _choose_tiles_lane_aligned(N, S, bin_num)
        x_r = x_nchw.reshape(N, S, 128).astype(jnp.float32)
        wb = jnp.stack([w2, b2], axis=0)          # (2, bin_num) -> SMEM
        grid = (pl.cdiv(S, TS), pl.cdiv(N, TN))   # spatial axis first (v7x 2-TC split)

        out = pl.pallas_call(
            functools.partial(_hist_kernel_lane_aligned, bin_num=bin_num),
            out_shape=jax.ShapeDtypeStruct((N, bin_num, S, 128), out_dtype),
            grid_spec=pltpu.PrefetchScalarGridSpec(
                num_scalar_prefetch=0,
                grid=grid,
                in_specs=[
                    pl.BlockSpec(memory_space=pltpu.MemorySpace.SMEM),   # wb
                    pl.BlockSpec((TN, TS, 128), lambda s, n: (n, s, 0)),  # x
                ],
                out_specs=pl.BlockSpec((TN, bin_num, TS, 128),
                                       lambda s, n: (n, 0, s, 0)),
            ),
            compiler_params=cparams,
            cost_estimate=cost,
        )(wb, x_r)
        return out.reshape(N, bin_num, H, W)

    # ---- ragged fallback path (no pad, no output slice; masked partial block) ------
    TN, TH = _choose_tiles_ragged(N, HW, bin_num)
    x_r = x_nchw.reshape(N, 1, HW).astype(jnp.float32)
    grid = (pl.cdiv(HW, TH), pl.cdiv(N, TN))

    out = pl.pallas_call(
        _hist_kernel_ragged,
        out_shape=jax.ShapeDtypeStruct((N, bin_num, HW), out_dtype),
        grid_spec=pltpu.PrefetchScalarGridSpec(
            num_scalar_prefetch=0,
            grid=grid,
            in_specs=[
                pl.BlockSpec((TN, 1, TH), lambda s, n: (n, 0, s)),
                pl.BlockSpec((bin_num, 1), lambda s, n: (0, 0)),
                pl.BlockSpec((bin_num, 1), lambda s, n: (0, 0)),
            ],
            out_specs=pl.BlockSpec((TN, bin_num, TH), lambda s, n: (n, 0, s)),
        ),
        compiler_params=cparams,
        cost_estimate=cost,
    )(x_r, w2.reshape(bin_num, 1), b2.reshape(bin_num, 1))
    return out.reshape(N, bin_num, H, W)


def histogram_net_ref(x_nchw, weight, bias, bin_num):
    # Pure-JAX reference matching the PyTorch forward.
    w = weight.reshape(1, bin_num, 1, 1)
    b = bias.reshape(1, bin_num, 1, 1)
    a1 = w * x_nchw + b                       # 1x1 conv, single input channel
    a2 = jnp.abs(a1)
    a3 = 1.0 - a2 * (bin_num - 1)
    return jnp.maximum(a3, 0.0)


if __name__ == "__main__":
    bin_num = 8
    key = jax.random.PRNGKey(0)

    # Deterministic parameter init (unit weights, bin centers spread over [0, 1]).
    weight = jnp.ones((bin_num, 1, 1, 1), dtype=jnp.float32)
    bias = -(jnp.arange(bin_num, dtype=jnp.float32) / (bin_num - 1))

    k1, k2, k3 = jax.random.split(key, 3)

    # Case 1: lane-aligned fast path (HW = 256, multiple of 128).
    x1 = jax.random.uniform(k1, (2, 1, 16, 16), dtype=jnp.float32)
    out1 = jax.block_until_ready(histogram_net(x1, weight, bias, bin_num))
    ref1 = histogram_net_ref(x1, weight, bias, bin_num)
    assert out1.shape == (2, bin_num, 16, 16)
    assert jnp.allclose(out1, ref1, atol=1e-5, rtol=1e-5)

    # Case 2: ragged path, HW < 128 (full-extent lane block, no padding).
    x2 = jax.random.uniform(k2, (1, 1, 10, 10), dtype=jnp.float32)
    out2 = jax.block_until_ready(histogram_net(x2, weight, bias, bin_num))
    ref2 = histogram_net_ref(x2, weight, bias, bin_num)
    assert out2.shape == (1, bin_num, 10, 10)
    assert jnp.allclose(out2, ref2, atol=1e-5, rtol=1e-5)

    # Case 3: ragged path, HW >= 128 (masked partial trailing spatial block).
    x3 = jax.random.uniform(k3, (2, 1, 12, 12), dtype=jnp.float32)
    out3 = jax.block_until_ready(histogram_net(x3, weight, bias, bin_num))
    ref3 = histogram_net_ref(x3, weight, bias, bin_num)
    assert out3.shape == (2, bin_num, 12, 12)
    assert jnp.allclose(out3, ref3, atol=1e-5, rtol=1e-5)

    print("KERNEL_OK")
</pallas_src>

<mosaic_0001>
module attributes {stable_mosaic.version = 11 : i64} {
  func.func @_hist_kernel_lane_aligned(%arg0: i32, %arg1: i32, %arg2: memref<2x8xf32, #tpu.memory_space<smem>>, %arg3: memref<2x2x128xf32, #tpu.memory_space<vmem>>, %arg4: memref<2x8x2x128xf32, #tpu.memory_space<vmem>>) attributes {dimension_semantics = [#tpu.dimension_semantics<parallel>, #tpu.dimension_semantics<parallel>], iteration_bounds = array<i64: 1, 1>, scalar_prefetch = 0 : i64, scratch_operands = 0 : i64, tpu.core_type = #tpu.core_type<tc>, window_params = [{transform_indices = @transform_0, window_bounds = array<i64: 2, 8>}, {transform_indices = @transform_1, window_bounds = array<i64: 2, 2, 128>}, {transform_indices = @transform_2, window_bounds = array<i64: 2, 8, 2, 128>}]} {
    %c0 = arith.constant 0 : index
    %c0_0 = arith.constant 0 : index
    %c0_1 = arith.constant 0 : index
    %0 = vector.load %arg3[%c0, %c0_0, %c0_1] : memref<2x2x128xf32, #tpu.memory_space<vmem>>, vector<2x2x128xf32>
    %c0_2 = arith.constant 0 : index
    %c0_3 = arith.constant 0 : index
    %1 = memref.load %arg2[%c0_2, %c0_3] : memref<2x8xf32, #tpu.memory_space<smem>>
    %c1 = arith.constant 1 : index
    %c0_4 = arith.constant 0 : index
    %2 = memref.load %arg2[%c1, %c0_4] : memref<2x8xf32, #tpu.memory_space<smem>>
    %3 = vector.broadcast %1 : f32 to vector<2x2x128xf32>
    %4 = arith.mulf %3, %0 : vector<2x2x128xf32>
    %5 = vector.broadcast %2 : f32 to vector<2x2x128xf32>
    %6 = arith.addf %4, %5 : vector<2x2x128xf32>
    %7 = math.absf %6 : vector<2x2x128xf32>
    %cst = arith.constant 1.000000e+00 : f32
    %8 = vector.broadcast %cst : f32 to vector<2x2x128xf32>
    %9 = arith.subf %8, %7 : vector<2x2x128xf32>
    %cst_5 = arith.constant 0.000000e+00 : f32
    %10 = vector.broadcast %cst_5 : f32 to vector<2x2x128xf32>
    %11 = arith.maximumf %9, %10 : vector<2x2x128xf32>
    %c0_6 = arith.constant 0 : index
    %c0_7 = arith.constant 0 : index
    %c0_8 = arith.constant 0 : index
    %c0_9 = arith.constant 0 : index
    %12 = vector.load %arg4[%c0_6, %c0_7, %c0_8, %c0_9] : memref<2x8x2x128xf32, #tpu.memory_space<vmem>>, vector<2x1x2x128xf32>
    %13 = vector.shape_cast %12 : vector<2x1x2x128xf32> to vector<2x2x128xf32>
    %14 = vector.shape_cast %11 : vector<2x2x128xf32> to vector<2x1x2x128xf32>
    tpu.vector_store %arg4[%c0_6, %c0_7, %c0_8, %c0_9], %14 {strides = array<i32>} : memref<2x8x2x128xf32, #tpu.memory_space<vmem>>, vector<2x1x2x128xf32>,
    %c0_10 = arith.constant 0 : index
    %c1_11 = arith.constant 1 : index
    %15 = memref.load %arg2[%c0_10, %c1_11] : memref<2x8xf32, #tpu.memory_space<smem>>
    %c1_12 = arith.constant 1 : index
    %c1_13 = arith.constant 1 : index
    %16 = memref.load %arg2[%c1_12, %c1_13] : memref<2x8xf32, #tpu.memory_space<smem>>
    %17 = vector.broadcast %15 : f32 to vector<2x2x128xf32>
    %18 = arith.mulf %17, %0 : vector<2x2x128xf32>
    %19 = vector.broadcast %16 : f32 to vector<2x2x128xf32>
    %20 = arith.addf %18, %19 : vector<2x2x128xf32>
    %21 = math.absf %20 : vector<2x2x128xf32>
    %cst_14 = arith.constant 1.000000e+00 : f32
    %22 = vector.broadcast %cst_14 : f32 to vector<2x2x128xf32>
    %23 = arith.subf %22, %21 : vector<2x2x128xf32>
    %cst_15 = arith.constant 0.000000e+00 : f32
    %24 = vector.broadcast %cst_15 : f32 to vector<2x2x128xf32>
    %25 = arith.maximumf %23, %24 : vector<2x2x128xf32>
    %c0_16 = arith.constant 0 : index
    %c1_17 = arith.constant 1 : index
    %c0_18 = arith.constant 0 : index
    %c0_19 = arith.constant 0 : index
    %26 = vector.load %arg4[%c0_16, %c1_17, %c0_18, %c0_19] : memref<2x8x2x128xf32, #tpu.memory_space<vmem>>, vector<2x1x2x128xf32>
    %27 = vector.shape_cast %26 : vector<2x1x2x128xf32> to vector<2x2x128xf32>
    %28 = vector.shape_cast %25 : vector<2x2x128xf32> to vector<2x1x2x128xf32>
    tpu.vector_store %arg4[%c0_16, %c1_17, %c0_18, %c0_19], %28 {strides = array<i32>} : memref<2x8x2x128xf32, #tpu.memory_space<vmem>>, vector<2x1x2x128xf32>,
    %c0_20 = arith.constant 0 : index
    %c2 = arith.constant 2 : index
    %29 = memref.load %arg2[%c0_20, %c2] : memref<2x8xf32, #tpu.memory_space<smem>>
    %c1_21 = arith.constant 1 : index
    %c2_22 = arith.constant 2 : index
    %30 = memref.load %arg2[%c1_21, %c2_22] : memref<2x8xf32, #tpu.memory_space<smem>>
    %31 = vector.broadcast %29 : f32 to vector<2x2x128xf32>
    %32 = arith.mulf %31, %0 : vector<2x2x128xf32>
    %33 = vector.broadcast %30 : f32 to vector<2x2x128xf32>
    %34 = arith.addf %32, %33 : vector<2x2x128xf32>
    %35 = math.absf %34 : vector<2x2x128xf32>
    %cst_23 = arith.constant 1.000000e+00 : f32
    %36 = vector.broadcast %cst_23 : f32 to vector<2x2x128xf32>
    %37 = arith.subf %36, %35 : vector<2x2x128xf32>
    %cst_24 = arith.constant 0.000000e+00 : f32
    %38 = vector.broadcast %cst_24 : f32 to vector<2x2x128xf32>
    %39 = arith.maximumf %37, %38 : vector<2x2x128xf32>
    %c0_25 = arith.constant 0 : index
    %c2_26 = arith.constant 2 : index
    %c0_27 = arith.constant 0 : index
    %c0_28 = arith.constant 0 : index
    %40 = vector.load %arg4[%c0_25, %c2_26, %c0_27, %c0_28] : memref<2x8x2x128xf32, #tpu.memory_space<vmem>>, vector<2x1x2x128xf32>
    %41 = vector.shape_cast %40 : vector<2x1x2x128xf32> to vector<2x2x128xf32>
    %42 = vector.shape_cast %39 : vector<2x2x128xf32> to vector<2x1x2x128xf32>
    tpu.vector_store %arg4[%c0_25, %c2_26, %c0_27, %c0_28], %42 {strides = array<i32>} : memref<2x8x2x128xf32, #tpu.memory_space<vmem>>, vector<2x1x2x128xf32>,
    %c0_29 = arith.constant 0 : index
    %c3 = arith.constant 3 : index
    %43 = memref.load %arg2[%c0_29, %c3] : memref<2x8xf32, #tpu.memory_space<smem>>
    %c1_30 = arith.constant 1 : index
    %c3_31 = arith.constant 3 : index
    %44 = memref.load %arg2[%c1_30, %c3_31] : memref<2x8xf32, #tpu.memory_space<smem>>
    %45 = vector.broadcast %43 : f32 to vector<2x2x128xf32>
    %46 = arith.mulf %45, %0 : vector<2x2x128xf32>
    %47 = vector.broadcast %44 : f32 to vector<2x2x128xf32>
    %48 = arith.addf %46, %47 : vector<2x2x128xf32>
    %49 = math.absf %48 : vector<2x2x128xf32>
    %cst_32 = arith.constant 1.000000e+00 : f32
    %50 = vector.broadcast %cst_32 : f32 to vector<2x2x128xf32>
    %51 = arith.subf %50, %49 : vector<2x2x128xf32>
    %cst_33 = arith.constant 0.000000e+00 : f32
    %52 = vector.broadcast %cst_33 : f32 to vector<2x2x128xf32>
    %53 = arith.maximumf %51, %52 : vector<2x2x128xf32>
    %c0_34 = arith.constant 0 : index
    %c3_35 = arith.constant 3 : index
    %c0_36 = arith.constant 0 : index
    %c0_37 = arith.constant 0 : index
    %54 = vector.load %arg4[%c0_34, %c3_35, %c0_36, %c0_37] : memref<2x8x2x128xf32, #tpu.memory_space<vmem>>, vector<2x1x2x128xf32>
    %55 = vector.shape_cast %54 : vector<2x1x2x128xf32> to vector<2x2x128xf32>
    %56 = vector.shape_cast %53 : vector<2x2x128xf32> to vector<2x1x2x128xf32>
    tpu.vector_store %arg4[%c0_34, %c3_35, %c0_36, %c0_37], %56 {strides = array<i32>} : memref<2x8x2x128xf32, #tpu.memory_space<vmem>>, vector<2x1x2x128xf32>,
    %c0_38 = arith.constant 0 : index
    %c4 = arith.constant 4 : index
    %57 = memref.load %arg2[%c0_38, %c4] : memref<2x8xf32, #tpu.memory_space<smem>>
    %c1_39 = arith.constant 1 : index
    %c4_40 = arith.constant 4 : index
    %58 = memref.load %arg2[%c1_39, %c4_40] : memref<2x8xf32, #tpu.memory_space<smem>>
    %59 = vector.broadcast %57 : f32 to vector<2x2x128xf32>
    %60 = arith.mulf %59, %0 : vector<2x2x128xf32>
    %61 = vector.broadcast %58 : f32 to vector<2x2x128xf32>
    %62 = arith.addf %60, %61 : vector<2x2x128xf32>
    %63 = math.absf %62 : vector<2x2x128xf32>
    %cst_41 = arith.constant 1.000000e+00 : f32
    %64 = vector.broadcast %cst_41 : f32 to vector<2x2x128xf32>
    %65 = arith.subf %64, %63 : vector<2x2x128xf32>
    %cst_42 = arith.constant 0.000000e+00 : f32
    %66 = vector.broadcast %cst_42 : f32 to vector<2x2x128xf32>
    %67 = arith.maximumf %65, %66 : vector<2x2x128xf32>
    %c0_43 = arith.constant 0 : index
    %c4_44 = arith.constant 4 : index
    %c0_45 = arith.constant 0 : index
    %c0_46 = arith.constant 0 : index
    %68 = vector.load %arg4[%c0_43, %c4_44, %c0_45, %c0_46] : memref<2x8x2x128xf32, #tpu.memory_space<vmem>>, vector<2x1x2x128xf32>
    %69 = vector.shape_cast %68 : vector<2x1x2x128xf32> to vector<2x2x128xf32>
    %70 = vector.shape_cast %67 : vector<2x2x128xf32> to vector<2x1x2x128xf32>
    tpu.vector_store %arg4[%c0_43, %c4_44, %c0_45, %c0_46], %70 {strides = array<i32>} : memref<2x8x2x128xf32, #tpu.memory_space<vmem>>, vector<2x1x2x128xf32>,
    %c0_47 = arith.constant 0 : index
    %c5 = arith.constant 5 : index
    %71 = memref.load %arg2[%c0_47, %c5] : memref<2x8xf32, #tpu.memory_space<smem>>
    %c1_48 = arith.constant 1 : index
    %c5_49 = arith.constant 5 : index
    %72 = memref.load %arg2[%c1_48, %c5_49] : memref<2x8xf32, #tpu.memory_space<smem>>
    %73 = vector.broadcast %71 : f32 to vector<2x2x128xf32>
    %74 = arith.mulf %73, %0 : vector<2x2x128xf32>
    %75 = vector.broadcast %72 : f32 to vector<2x2x128xf32>
    %76 = arith.addf %74, %75 : vector<2x2x128xf32>
    %77 = math.absf %76 : vector<2x2x128xf32>
    %cst_50 = arith.constant 1.000000e+00 : f32
    %78 = vector.broadcast %cst_50 : f32 to vector<2x2x128xf32>
    %79 = arith.subf %78, %77 : vector<2x2x128xf32>
    %cst_51 = arith.constant 0.000000e+00 : f32
    %80 = vector.broadcast %cst_51 : f32 to vector<2x2x128xf32>
    %81 = arith.maximumf %79, %80 : vector<2x2x128xf32>
    %c0_52 = arith.constant 0 : index
    %c5_53 = arith.constant 5 : index
    %c0_54 = arith.constant 0 : index
    %c0_55 = arith.constant 0 : index
    %82 = vector.load %arg4[%c0_52, %c5_53, %c0_54, %c0_55] : memref<2x8x2x128xf32, #tpu.memory_space<vmem>>, vector<2x1x2x128xf32>
    %83 = vector.shape_cast %82 : vector<2x1x2x128xf32> to vector<2x2x128xf32>
    %84 = vector.shape_cast %81 : vector<2x2x128xf32> to vector<2x1x2x128xf32>
    tpu.vector_store %arg4[%c0_52, %c5_53, %c0_54, %c0_55], %84 {strides = array<i32>} : memref<2x8x2x128xf32, #tpu.memory_space<vmem>>, vector<2x1x2x128xf32>,
    %c0_56 = arith.constant 0 : index
    %c6 = arith.constant 6 : index
    %85 = memref.load %arg2[%c0_56, %c6] : memref<2x8xf32, #tpu.memory_space<smem>>
    %c1_57 = arith.constant 1 : index
    %c6_58 = arith.constant 6 : index
    %86 = memref.load %arg2[%c1_57, %c6_58] : memref<2x8xf32, #tpu.memory_space<smem>>
    %87 = vector.broadcast %85 : f32 to vector<2x2x128xf32>
    %88 = arith.mulf %87, %0 : vector<2x2x128xf32>
    %89 = vector.broadcast %86 : f32 to vector<2x2x128xf32>
    %90 = arith.addf %88, %89 : vector<2x2x128xf32>
    %91 = math.absf %90 : vector<2x2x128xf32>
    %cst_59 = arith.constant 1.000000e+00 : f32
    %92 = vector.broadcast %cst_59 : f32 to vector<2x2x128xf32>
    %93 = arith.subf %92, %91 : vector<2x2x128xf32>
    %cst_60 = arith.constant 0.000000e+00 : f32
    %94 = vector.broadcast %cst_60 : f32 to vector<2x2x128xf32>
    %95 = arith.maximumf %93, %94 : vector<2x2x128xf32>
    %c0_61 = arith.constant 0 : index
    %c6_62 = arith.constant 6 : index
    %c0_63 = arith.constant 0 : index
    %c0_64 = arith.constant 0 : index
    %96 = vector.load %arg4[%c0_61, %c6_62, %c0_63, %c0_64] : memref<2x8x2x128xf32, #tpu.memory_space<vmem>>, vector<2x1x2x128xf32>
    %97 = vector.shape_cast %96 : vector<2x1x2x128xf32> to vector<2x2x128xf32>
    %98 = vector.shape_cast %95 : vector<2x2x128xf32> to vector<2x1x2x128xf32>
    tpu.vector_store %arg4[%c0_61, %c6_62, %c0_63, %c0_64], %98 {strides = array<i32>} : memref<2x8x2x128xf32, #tpu.memory_space<vmem>>, vector<2x1x2x128xf32>,
    %c0_65 = arith.constant 0 : index
    %c7 = arith.constant 7 : index
    %99 = memref.load %arg2[%c0_65, %c7] : memref<2x8xf32, #tpu.memory_space<smem>>
    %c1_66 = arith.constant 1 : index
    %c7_67 = arith.constant 7 : index
    %100 = memref.load %arg2[%c1_66, %c7_67] : memref<2x8xf32, #tpu.memory_space<smem>>
    %101 = vector.broadcast %99 : f32 to vector<2x2x128xf32>
    %102 = arith.mulf %101, %0 : vector<2x2x128xf32>
    %103 = vector.broadcast %100 : f32 to vector<2x2x128xf32>
    %104 = arith.addf %102, %103 : vector<2x2x128xf32>
    %105 = math.absf %104 : vector<2x2x128xf32>
    %cst_68 = arith.constant 1.000000e+00 : f32
    %106 = vector.broadcast %cst_68 : f32 to vector<2x2x128xf32>
    %107 = arith.subf %106, %105 : vector<2x2x128xf32>
    %cst_69 = arith.constant 0.000000e+00 : f32
    %108 = vector.broadcast %cst_69 : f32 to vector<2x2x128xf32>
    %109 = arith.maximumf %107, %108 : vector<2x2x128xf32>
    %c0_70 = arith.constant 0 : index
    %c7_71 = arith.constant 7 : index
    %c0_72 = arith.constant 0 : index
    %c0_73 = arith.constant 0 : index
    %110 = vector.load %arg4[%c0_70, %c7_71, %c0_72, %c0_73] : memref<2x8x2x128xf32, #tpu.memory_space<vmem>>, vector<2x1x2x128xf32>
    %111 = vector.shape_cast %110 : vector<2x1x2x128xf32> to vector<2x2x128xf32>
    %112 = vector.shape_cast %109 : vector<2x2x128xf32> to vector<2x1x2x128xf32>
    tpu.vector_store %arg4[%c0_70, %c7_71, %c0_72, %c0_73], %112 {strides = array<i32>} : memref<2x8x2x128xf32, #tpu.memory_space<vmem>>, vector<2x1x2x128xf32>,
    return
  }
  func.func @transform_0(%arg0: i32, %arg1: i32) -> (i32, i32) {
    %c0_i32 = arith.constant 0 : i32
    %c0_i32_0 = arith.constant 0 : i32
    %c0_i32_1 = arith.constant 0 : i32
    return %c0_i32, %c0_i32_0 : i32, i32
  }
  func.func @transform_1(%arg0: i32, %arg1: i32) -> (i32, i32, i32) {
    %c0_i32 = arith.constant 0 : i32
    %c0_i32_0 = arith.constant 0 : i32
    return %arg1, %arg0, %c0_i32 : i32, i32, i32
  }
  func.func @transform_2(%arg0: i32, %arg1: i32) -> (i32, i32, i32, i32) {
    %c0_i32 = arith.constant 0 : i32
    %c0_i32_0 = arith.constant 0 : i32
    %c0_i32_1 = arith.constant 0 : i32
    return %arg1, %c0_i32, %arg0, %c0_i32_0 : i32, i32, i32, i32
  }
}

</mosaic_0001>

<llo_original>
// kernel: tpu_custom_call.1
$region0: #{tpu_custom_call.1}
  #allocation0 [shape = 'u32[]', space=smem, size = 0x4, offset = 0x4, fixed_abs, tag = 'smem constant byte address 0x4 - core index']
  #allocation1 [shape = 'u32[72,128]{1,0:T(1,128)}', space=vmem, size = 0x9000, scoped, tag = 'internal scratch']
  %s0 = inlined_call_operand.hbm [shape: f32[2,8], index: 0, kind: input, shape index: {}]
  %s1 = inlined_call_operand.hbm [shape: f32[2,2,128], index: 1, kind: input, shape index: {}]
  %s2 = inlined_call_operand.hbm [shape: f32[2,8,2,128], index: 2, kind: output, shape index: {}]
  %s3 = sld [smem:[#allocation0]]
  $region26: #{tpu_custom_call.1} parent=0
    _
  %s5 = ssub.s32 1, %s3
  %s6 = scalar_select 0, %s5, %s3
  $region1: #{tpu_custom_call.1} parent=0
    #allocation2 [shape = 'u8[1024]{0}', space=smem, size = 0x400, scoped, tag = 'input window, operand 0, single buffered']
    #allocation3 [shape = 's32[1]{0}', space=sflag, size = 0x4, scoped, tag = 'scoped memory for tpu_custom_call.1']
    #allocation4 [shape = 's32[1]{0}', space=sflag, size = 0x4, scoped, tag = 'scoped memory for tpu_custom_call.1']
    #allocation5 [shape = 's32[1]{0}', space=sflag, size = 0x4, scoped, tag = 'scoped memory for tpu_custom_call.1']
    #allocation6 [shape = 'u8[2048]{0}', space=vmem, size = 0x800, scoped, tag = 'input window, operand 1, single buffered']
    #allocation7 [shape = 'u8[16384]{0}', space=vmem, size = 0x4000, scoped, tag = 'output window, operand 0, single buffered']
    %7 = vsyncpa [#allocation5], 0
    %8 = vsyncpa [#allocation3], 0
    %9 = vsyncpa [#allocation4], 0
    // Predicated region
    $region2: #{tpu_custom_call.1} parent=1 // pred_check
      _
    $region3: #{tpu_custom_call.1} parent=1 // pred_check_branch
      %11 = sbr.rel (0) target = $region5
    $region4: #{tpu_custom_call.1} parent=1 // pred_region
      %13 = vsyncadd [#allocation5], 0
      %s15 = sshll.u32 %s0, 4
      %s16 = int_to_ptr.hbm [resolvable:$true] %s15
      %18 = dma.hbm_to_smem %s16, 32, [#allocation2], [#allocation5]
    $region5: #{tpu_custom_call.1} parent=1 // pred_fallthru
      _
    // Predicated region
    $region6: #{tpu_custom_call.1} parent=1 // pred_check
      _
    $region7: #{tpu_custom_call.1} parent=1 // pred_check_branch
      %20 = sbr.rel (0) target = $region9
    $region8: #{tpu_custom_call.1} parent=1 // pred_region
      %22 = vsyncadd [#allocation3], 0
      %s23 = sshll.u32 %s1, 4
      %s24 = int_to_ptr.hbm [resolvable:$true] %s23
      %s25 = sshll.u32 [#allocation6], 4
      %s26 = int_to_ptr.vmem [resolvable:$true] %s25
      %31 = dma.hbm_to_vmem [thread:$0]  %s24, 64, %s26, [#allocation3], 32, 32, 2
    $region9: #{tpu_custom_call.1} parent=1 // pred_fallthru
      _
    // Predicated region
    $region10: #{tpu_custom_call.1} parent=1 // pred_check
      _
    $region11: #{tpu_custom_call.1} parent=1 // pred_check_branch
      %33 = sbr.rel (0) target = $region13
    $region12: #{tpu_custom_call.1} parent=1 // pred_region
      %35 = dma.done [#allocation5], 32
    $region13: #{tpu_custom_call.1} parent=1 // pred_fallthru
      _
    // Predicated region
    $region14: #{tpu_custom_call.1} parent=1 // pred_check
      _
    $region15: #{tpu_custom_call.1} parent=1 // pred_check_branch
      %37 = sbr.rel (0) target = $region17
    $region16: #{tpu_custom_call.1} parent=1 // pred_region
      %39 = dma.done [#allocation3], 64
    $region17: #{tpu_custom_call.1} parent=1 // pred_fallthru
      _
    %40 = sfence
    %v41 = vld [vmem:[#allocation6] sm:$0x3]
    %v42 = vld [vmem:[#allocation6 + $0x2] sm:$0x3]
    %s43 = sld [smem:[#allocation2]]
    %s44 = sld [smem:[#allocation2 + $0x80]]
    %v45 = vstv %s43
    %v46 = vmul.f32 %v45, %v41
    %v47 = vmul.f32 %v45, %v42
    %v48 = vstv %s44
    %v49 = vadd.f32 %v46, %v48
    %v50 = vadd.f32 %v47, %v48
    %v51 = vand.u32 2147483647, %v49
    %v52 = vand.u32 2147483647, %v50
    %v53 = vsub.f32 1.0, %v51
    %v54 = vsub.f32 1.0, %v52
    %v55 = vmax.f32 %v53, 0.0
    %v56 = vmax.f32 %v54, 0.0
    %57 = vst [vmem:[#allocation7] sm:$0x3] %v55
    %58 = vst [vmem:[#allocation7 + $0x10] sm:$0x3] %v56
    %s59 = sld [smem:[#allocation2 + $0x1]]
    %s60 = sld [smem:[#allocation2 + $0x81]]
    %v61 = vstv %s59
    %v62 = vmul.f32 %v61, %v41
    %v63 = vmul.f32 %v61, %v42
    %v64 = vstv %s60
    %v65 = vadd.f32 %v62, %v64
    %v66 = vadd.f32 %v63, %v64
    %v67 = vand.u32 2147483647, %v65
    %v68 = vand.u32 2147483647, %v66
    %v69 = vsub.f32 1.0, %v67
    %v70 = vsub.f32 1.0, %v68
    %v71 = vmax.f32 %v69, 0.0
    %v72 = vmax.f32 %v70, 0.0
    %s73 = scalar_lea.vmem [#allocation7], 2
    %74 = vst [vmem:[%s73] sm:$0x3] %v71
    %75 = vst [vmem:[%s73 + $0x10] sm:$0x3] %v72
    %s76 = sld [smem:[#allocation2 + $0x2]]
    %s77 = sld [smem:[#allocation2 + $0x82]]
    %v78 = vstv %s76
    %v79 = vmul.f32 %v78, %v41
    %v80 = vmul.f32 %v78, %v42
    %v81 = vstv %s77
    %v82 = vadd.f32 %v79, %v81
    %v83 = vadd.f32 %v80, %v81
    %v84 = vand.u32 2147483647, %v82
    %v85 = vand.u32 2147483647, %v83
    %v86 = vsub.f32 1.0, %v84
    %v87 = vsub.f32 1.0, %v85
    %v88 = vmax.f32 %v86, 0.0
    %v89 = vmax.f32 %v87, 0.0
    %s90 = scalar_lea.vmem [#allocation7], 4
    %91 = vst [vmem:[%s90] sm:$0x3] %v88
    %92 = vst [vmem:[%s90 + $0x10] sm:$0x3] %v89
    %s93 = sld [smem:[#allocation2 + $0x3]]
    %s94 = sld [smem:[#allocation2 + $0x83]]
    %v95 = vstv %s93
    %v96 = vmul.f32 %v95, %v41
    %v97 = vmul.f32 %v95, %v42
    %v98 = vstv %s94
    %v99 = vadd.f32 %v96, %v98
    %v100 = vadd.f32 %v97, %v98
    %v101 = vand.u32 2147483647, %v99
    %v102 = vand.u32 2147483647, %v100
    %v103 = vsub.f32 1.0, %v101
    %v104 = vsub.f32 1.0, %v102
    %v105 = vmax.f32 %v103, 0.0
    %v106 = vmax.f32 %v104, 0.0
    %s107 = scalar_lea.vmem [#allocation7], 6
    %108 = vst [vmem:[%s107] sm:$0x3] %v105
    %109 = vst [vmem:[%s107 + $0x10] sm:$0x3] %v106
    %s110 = sld [smem:[#allocation2 + $0x4]]
    %s111 = sld [smem:[#allocation2 + $0x84]]
    %v112 = vstv %s110
    %v113 = vmul.f32 %v112, %v41
    %v114 = vmul.f32 %v112, %v42
    %v115 = vstv %s111
    %v116 = vadd.f32 %v113, %v115
    %v117 = vadd.f32 %v114, %v115
    %v118 = vand.u32 2147483647, %v116
    %v119 = vand.u32 2147483647, %v117
    %v120 = vsub.f32 1.0, %v118
    %v121 = vsub.f32 1.0, %v119
    %v122 = vmax.f32 %v120, 0.0
    %v123 = vmax.f32 %v121, 0.0
    %s124 = scalar_lea.vmem [#allocation7], 8
    %125 = vst [vmem:[%s124] sm:$0x3] %v122
    %126 = vst [vmem:[%s124 + $0x10] sm:$0x3] %v123
    %s127 = sld [smem:[#allocation2 + $0x5]]
    %s128 = sld [smem:[#allocation2 + $0x85]]
    %v129 = vstv %s127
    %v130 = vmul.f32 %v129, %v41
    %v131 = vmul.f32 %v129, %v42
    %v132 = vstv %s128
    %v133 = vadd.f32 %v130, %v132
    %v134 = vadd.f32 %v131, %v132
    %v135 = vand.u32 2147483647, %v133
    %v136 = vand.u32 2147483647, %v134
    %v137 = vsub.f32 1.0, %v135
    %v138 = vsub.f32 1.0, %v136
    %v139 = vmax.f32 %v137, 0.0
    %v140 = vmax.f32 %v138, 0.0
    %s141 = scalar_lea.vmem [#allocation7], 10
    %142 = vst [vmem:[%s141] sm:$0x3] %v139
    %143 = vst [vmem:[%s141 + $0x10] sm:$0x3] %v140
    %s144 = sld [smem:[#allocation2 + $0x6]]
    %s145 = sld [smem:[#allocation2 + $0x86]]
    %v146 = vstv %s144
    %v147 = vmul.f32 %v146, %v41
    %v148 = vmul.f32 %v146, %v42
    %v149 = vstv %s145
    %v150 = vadd.f32 %v147, %v149
    %v151 = vadd.f32 %v148, %v149
    %v152 = vand.u32 2147483647, %v150
    %v153 = vand.u32 2147483647, %v151
    %v154 = vsub.f32 1.0, %v152
    %v155 = vsub.f32 1.0, %v153
    %v156 = vmax.f32 %v154, 0.0
    %v157 = vmax.f32 %v155, 0.0
    %s158 = scalar_lea.vmem [#allocation7], 12
    %159 = vst [vmem:[%s158] sm:$0x3] %v156
    %160 = vst [vmem:[%s158 + $0x10] sm:$0x3] %v157
    %s161 = sld [smem:[#allocation2 + $0x7]]
    %s162 = sld [smem:[#allocation2 + $0x87]]
    %v163 = vstv %s161
    %v164 = vmul.f32 %v163, %v41
    %v165 = vmul.f32 %v163, %v42
    %v166 = vstv %s162
    %v167 = vadd.f32 %v164, %v166
    %v168 = vadd.f32 %v165, %v166
    %v169 = vand.u32 2147483647, %v167
    %v170 = vand.u32 2147483647, %v168
    %v171 = vsub.f32 1.0, %v169
    %v172 = vsub.f32 1.0, %v170
    %v173 = vmax.f32 %v171, 0.0
    %v174 = vmax.f32 %v172, 0.0
    %s175 = scalar_lea.vmem [#allocation7], 14
    %176 = vst [vmem:[%s175] sm:$0x3] %v173
    %177 = vst [vmem:[%s175 + $0x10] sm:$0x3] %v174
    // Predicated region
    $region18: #{tpu_custom_call.1} parent=1 // pred_check
      _
    $region19: #{tpu_custom_call.1} parent=1 // pred_check_branch
      %179 = sbr.rel (0) target = $region21
    $region20: #{tpu_custom_call.1} parent=1 // pred_region
      %181 = vsyncadd [#allocation4], 0
      %s182 = sshll.u32 [#allocation7], 4
      %s183 = int_to_ptr.vmem [resolvable:$true] %s182
      %s184 = sshll.u32 %s2, 4
      %s185 = int_to_ptr.hbm [resolvable:$true] %s184
      %190 = dma.vmem_to_hbm [thread:$0]  %s183, 512, %s185, [#allocation4], 32, 32, 2
    $region21: #{tpu_custom_call.1} parent=1 // pred_fallthru
      _
    // Predicated region
    $region22: #{tpu_custom_call.1} parent=1 // pred_check
      _
    $region23: #{tpu_custom_call.1} parent=1 // pred_check_branch
      %192 = sbr.rel (0) target = $region25
    $region24: #{tpu_custom_call.1} parent=1 // pred_region
      %194 = dma.done [#allocation4], 512
    $region25: #{tpu_custom_call.1} parent=1 // pred_fallthru
      _
    %195 = vsyncpa [#allocation3], 1
    %196 = vsyncpa [#allocation4], 1
    %197 = vsyncpa [#allocation5], 1

</llo_original>
